<compile_context>
chip_gen: v6e
topology: v6e:2x2x1
jax: 0.10.0
libtpu: 0.0.40
codegen_flags: <defaults>
</compile_context>

<pallas_src>
import functools

import jax
import jax.numpy as jnp
from jax import lax
from jax.experimental import pallas as pl
from jax.experimental.pallas import tpu as pltpu


def _round_up(x, m):
    return ((x + m - 1) // m) * m


def _bce_partial_kernel(x_ref, t_ref, o_ref, *, tb, blocks_per_core, total_rows,
                        needs_mask):
    j = pl.program_id(1)          # reduction axis ("arbitrary")

    # Zero this core's resident accumulator block at the start of its sweep.
    @pl.when(j == 0)
    def _():
        o_ref[...] = jnp.zeros_like(o_ref)

    x = x_ref[...].astype(jnp.float32)
    t = t_ref[...].astype(jnp.float32)

    # torch.clamp_min(torch.log(.), -100)   (EUP logs; clamp avoids inf - inf)
    log_x = jnp.maximum(jnp.log(x), -100.0)
    log_1mx = jnp.maximum(jnp.log(1.0 - x), -100.0)

    # t*log_x + (1-t)*log_1mx  ==  t*(log_x - log_1mx) + log_1mx
    # (the -label_weights scale is per-column and applied once in the wrapper).
    inner = t * (log_x - log_1mx) + log_1mx

    if needs_mask:
        p = pl.program_id(0)
        row0 = (p * blocks_per_core + j) * tb
        rows = row0 + lax.broadcasted_iota(jnp.int32, inner.shape, 0)
        inner = jnp.where(rows < total_rows, inner, 0.0)

    # Row-axis (sublane) partial reduction only; the single cross-lane
    # reduction and mean/sum scaling happen once, in the wrapper.
    partial = jnp.sum(inner, axis=0, keepdims=True)          # (1, L)
    o_ref[...] += partial[None]                                # (1, 1, L)


def label_weighted_bce_loss(inp, target, label_weights, reduction="mean", *,
                            num_cores=2, target_tile_bytes=2 * 1024 * 1024):
    """inp, target: (B, L); label_weights: (L,). Returns scalar f32 loss."""
    if reduction not in ("mean", "sum"):
        raise ValueError(f"unsupported reduction: {reduction!r}")

    B, L = inp.shape
    assert target.shape == (B, L)
    assert label_weights.shape == (L,)

    # Sublane granularity of the input tiles (f32 -> 8, bf16/f16 -> 16, 8-bit -> 32).
    min_item = min(jnp.dtype(inp.dtype).itemsize, jnp.dtype(target.dtype).itemsize)
    sub = {4: 8, 2: 16, 1: 32}.get(min_item, 8)

    # Row tile: as many rows as fit the per-buffer byte budget (big DMAs for a
    # memory-bound kernel), capped at one core's share of the batch.
    max_item = max(jnp.dtype(inp.dtype).itemsize, jnp.dtype(target.dtype).itemsize)
    bytes_per_row = L * max_item
    tb_budget = max(sub, (target_tile_bytes // max(bytes_per_row, 1)) // sub * sub)
    tb = min(tb_budget, _round_up(pl.cdiv(B, num_cores), sub))
    # TODO(synk): for very large L, additionally tile the label axis in lane chunks.

    blocks_total = pl.cdiv(B, tb)
    num_cores = max(1, min(num_cores, blocks_total))
    blocks_per_core = pl.cdiv(blocks_total, num_cores)
    even_split = (blocks_per_core * num_cores == blocks_total)
    needs_mask = (B % tb != 0) or not even_split

    if even_split:
        def data_idx(p, j):
            return (p * blocks_per_core + j, 0)
    else:
        # A core's trailing block(s) may fall past the real data: clamp the
        # block index (the in-kernel row mask zeroes duplicated / padded rows).
        def data_idx(p, j):
            return (jnp.minimum(p * blocks_per_core + j, blocks_total - 1), 0)

    kernel = functools.partial(
        _bce_partial_kernel, tb=tb, blocks_per_core=blocks_per_core,
        total_rows=B, needs_mask=needs_mask)

    partials = pl.pallas_call(
        kernel,
        out_shape=jax.ShapeDtypeStruct((num_cores, 1, L), jnp.float32),
        grid_spec=pltpu.PrefetchScalarGridSpec(
            num_scalar_prefetch=0,
            grid=(num_cores, blocks_per_core),
            in_specs=[
                pl.BlockSpec((tb, L), data_idx),   # input tile
                pl.BlockSpec((tb, L), data_idx),   # target tile
            ],
            out_specs=pl.BlockSpec((1, 1, L), lambda p, j: (p, 0, 0)),
        ),
        compiler_params=pltpu.CompilerParams(
            dimension_semantics=("parallel", "arbitrary"),
        ),
    )(inp, target)

    # Combine cores, apply the per-label weight once, reduce across labels.
    per_label = jnp.sum(partials.reshape(num_cores, L), axis=0)       # (L,)
    total = jnp.sum(-label_weights.astype(jnp.float32) * per_label)   # scalar
    if reduction == "mean":
        total = total / (B * L)
    return total


def _reference(inp, target, label_weights, reduction="mean"):
    x = inp.astype(jnp.float32)
    t = target.astype(jnp.float32)
    w = label_weights.astype(jnp.float32)
    log_x = jnp.maximum(jnp.log(x), -100.0)
    log_1mx = jnp.maximum(jnp.log(1.0 - x), -100.0)
    losses = -w[None, :] * (t * log_x + (1.0 - t) * log_1mx)
    return jnp.mean(losses) if reduction == "mean" else jnp.sum(losses)


if __name__ == "__main__":
    key = jax.random.PRNGKey(0)
    k1, k2, k3 = jax.random.split(key, 3)

    # Case 1: aligned batch, mean reduction, log-clamp edge cases (0 and 1 probs).
    B, L = 16, 128
    inp = jax.random.uniform(k1, (B, L), jnp.float32, 1e-4, 1.0 - 1e-4)
    inp = inp.at[0, 0].set(0.0).at[0, 1].set(1.0)
    target = (jax.random.uniform(k2, (B, L)) > 0.5).astype(jnp.float32)
    label_weights = jax.random.uniform(k3, (L,), jnp.float32)

    loss = jax.block_until_ready(
        label_weighted_bce_loss(inp, target, label_weights, "mean"))
    ref = _reference(inp, target, label_weights, "mean")
    assert jnp.allclose(loss, ref, rtol=1e-5, atol=1e-5), (loss, ref)

    # Case 2: ragged batch (B not a multiple of the tile), sum reduction.
    B2 = 13
    inp2 = jax.random.uniform(k1, (B2, L), jnp.float32, 1e-4, 1.0 - 1e-4)
    tgt2 = (jax.random.uniform(k2, (B2, L)) > 0.5).astype(jnp.float32)
    loss2 = jax.block_until_ready(
        label_weighted_bce_loss(inp2, tgt2, label_weights, "sum"))
    ref2 = _reference(inp2, tgt2, label_weights, "sum")
    assert jnp.allclose(loss2, ref2, rtol=1e-4, atol=1e-4), (loss2, ref2)

    # Case 3: uneven block split across the parallel axis (exercises the
    # clamped block index + full row mask) by forcing a tiny tile.
    B3 = 20
    inp3 = jax.random.uniform(k1, (B3, L), jnp.float32, 1e-4, 1.0 - 1e-4)
    tgt3 = (jax.random.uniform(k2, (B3, L)) > 0.5).astype(jnp.float32)
    loss3 = jax.block_until_ready(
        label_weighted_bce_loss(inp3, tgt3, label_weights, "mean",
                                target_tile_bytes=4096))
    ref3 = _reference(inp3, tgt3, label_weights, "mean")
    assert jnp.allclose(loss3, ref3, rtol=1e-5, atol=1e-5), (loss3, ref3)

    print("KERNEL_OK")
</pallas_src>

<mosaic_0001>
module attributes {stable_mosaic.version = 11 : i64} {
  func.func @_bce_partial_kernel(%arg0: i32, %arg1: i32, %arg2: memref<8x128xf32, #tpu.memory_space<vmem>>, %arg3: memref<8x128xf32, #tpu.memory_space<vmem>>, %arg4: memref<1x1x128xf32, #tpu.memory_space<vmem>>) attributes {dimension_semantics = [#tpu.dimension_semantics<parallel>, #tpu.dimension_semantics<arbitrary>], iteration_bounds = array<i64: 2, 1>, scalar_prefetch = 0 : i64, scratch_operands = 0 : i64, tpu.core_type = #tpu.core_type<tc>, window_params = [{transform_indices = @transform_0, window_bounds = array<i64: 8, 128>}, {transform_indices = @transform_1, window_bounds = array<i64: 8, 128>}, {transform_indices = @transform_2, window_bounds = array<i64: 1, 1, 128>}]} {
    %c0_i32 = arith.constant 0 : i32
    %0 = arith.cmpi eq, %arg1, %c0_i32 : i32
    %1 = arith.extui %0 : i1 to i32
    %c0_i32_0 = arith.constant 0 : i32
    %2 = arith.cmpi ne, %1, %c0_i32_0 : i32
    scf.if %2 {
      %cst_13 = arith.constant 0.000000e+00 : f32
      %22 = vector.broadcast %cst_13 : f32 to vector<1x1x128xf32>
      %c0_14 = arith.constant 0 : index
      %c0_15 = arith.constant 0 : index
      %c0_16 = arith.constant 0 : index
      %23 = vector.load %arg4[%c0_14, %c0_15, %c0_16] : memref<1x1x128xf32, #tpu.memory_space<vmem>>, vector<1x1x128xf32>
      tpu.vector_store %arg4[%c0_14, %c0_15, %c0_16], %22 {strides = array<i32>} : memref<1x1x128xf32, #tpu.memory_space<vmem>>, vector<1x1x128xf32>,
    } else {
    }
    %c0 = arith.constant 0 : index
    %c0_1 = arith.constant 0 : index
    %3 = vector.load %arg2[%c0, %c0_1] : memref<8x128xf32, #tpu.memory_space<vmem>>, vector<8x128xf32>
    %c0_2 = arith.constant 0 : index
    %c0_3 = arith.constant 0 : index
    %4 = vector.load %arg3[%c0_2, %c0_3] : memref<8x128xf32, #tpu.memory_space<vmem>>, vector<8x128xf32>
    %5 = math.log %3 : vector<8x128xf32>
    %cst = arith.constant -1.000000e+02 : f32
    %6 = vector.broadcast %cst : f32 to vector<8x128xf32>
    %7 = arith.maximumf %5, %6 : vector<8x128xf32>
    %cst_4 = arith.constant 1.000000e+00 : f32
    %8 = vector.broadcast %cst_4 : f32 to vector<8x128xf32>
    %9 = arith.subf %8, %3 : vector<8x128xf32>
    %10 = math.log %9 : vector<8x128xf32>
    %cst_5 = arith.constant -1.000000e+02 : f32
    %11 = vector.broadcast %cst_5 : f32 to vector<8x128xf32>
    %12 = arith.maximumf %10, %11 : vector<8x128xf32>
    %13 = arith.subf %7, %12 : vector<8x128xf32>
    %14 = arith.mulf %4, %13 : vector<8x128xf32>
    %15 = arith.addf %14, %12 : vector<8x128xf32>
    %cst_6 = arith.constant dense<0.000000e+00> : vector<128xf32>
    %16 = vector.multi_reduction <add>, %15, %cst_6 [0] : vector<8x128xf32> to vector<128xf32>
    %17 = vector.shape_cast %16 : vector<128xf32> to vector<1x128xf32>
    %c0_7 = arith.constant 0 : index
    %c0_8 = arith.constant 0 : index
    %c0_9 = arith.constant 0 : index
    %18 = vector.load %arg4[%c0_7, %c0_8, %c0_9] : memref<1x1x128xf32, #tpu.memory_space<vmem>>, vector<1x1x128xf32>
    %19 = vector.shape_cast %17 : vector<1x128xf32> to vector<1x1x128xf32>
    %20 = arith.addf %18, %19 : vector<1x1x128xf32>
    %c0_10 = arith.constant 0 : index
    %c0_11 = arith.constant 0 : index
    %c0_12 = arith.constant 0 : index
    %21 = vector.load %arg4[%c0_10, %c0_11, %c0_12] : memref<1x1x128xf32, #tpu.memory_space<vmem>>, vector<1x1x128xf32>
    tpu.vector_store %arg4[%c0_10, %c0_11, %c0_12], %20 {strides = array<i32>} : memref<1x1x128xf32, #tpu.memory_space<vmem>>, vector<1x1x128xf32>,
    return
  }
  func.func @transform_0(%arg0: i32, %arg1: i32) -> (i32, i32) {
    %c1_i32 = arith.constant 1 : i32
    %0 = arith.muli %arg0, %c1_i32 : i32
    %1 = arith.addi %0, %arg1 : i32
    %c0_i32 = arith.constant 0 : i32
    %c0_i32_0 = arith.constant 0 : i32
    return %1, %c0_i32 : i32, i32
  }
  func.func @transform_1(%arg0: i32, %arg1: i32) -> (i32, i32) {
    %c1_i32 = arith.constant 1 : i32
    %0 = arith.muli %arg0, %c1_i32 : i32
    %1 = arith.addi %0, %arg1 : i32
    %c0_i32 = arith.constant 0 : i32
    %c0_i32_0 = arith.constant 0 : i32
    return %1, %c0_i32 : i32, i32
  }
  func.func @transform_2(%arg0: i32, %arg1: i32) -> (i32, i32, i32) {
    %c0_i32 = arith.constant 0 : i32
    %c0_i32_0 = arith.constant 0 : i32
    %c0_i32_1 = arith.constant 0 : i32
    return %arg0, %c0_i32, %c0_i32_0 : i32, i32, i32
  }
}

</mosaic_0001>

<llo_original>
// kernel: tpu_custom_call.1
$region0: #{tpu_custom_call.1}
  #allocation0 [shape = 'u32[]', space=smem, size = 0x4, offset = 0x4, fixed_abs, tag = 'smem constant byte address 0x4 - core index']
  #allocation1 [shape = 'u32[144,128]{1,0:T(1,128)}', space=vmem, size = 0x12000, scoped, tag = 'internal scratch']
  %s0 = inlined_call_operand.hbm [shape: f32[16,128], index: 0, kind: input, shape index: {}]
  %s1 = inlined_call_operand.hbm [shape: f32[16,128], index: 1, kind: input, shape index: {}]
  %s2 = inlined_call_operand.hbm [shape: f32[2,1,128], index: 2, kind: output, shape index: {}]
  %s3 = sld [smem:[#allocation0]]
  $region53: #{tpu_custom_call.1} parent=0
    _
  %s5 = ssub.s32 1, %s3
  %s6 = scalar_select 0, %s5, %s3
  $region1: #{tpu_custom_call.1} parent=0
    #allocation2 [shape = 'u8[8192]{0}', space=vmem, size = 0x2000, scoped, tag = 'input window, operand 0']
    #allocation3 [shape = 's32[2]{0}', space=sflag, size = 0x8, scoped, tag = 'scoped memory for tpu_custom_call.1']
    #allocation4 [shape = 's32[2]{0}', space=sflag, size = 0x8, scoped, tag = 'scoped memory for tpu_custom_call.1']
    #allocation5 [shape = 'u8[8192]{0}', space=vmem, size = 0x2000, scoped, tag = 'input window, operand 1']
    #allocation6 [shape = 's32[2]{0}', space=sflag, size = 0x8, scoped, tag = 'scoped memory for tpu_custom_call.1']
    #allocation7 [shape = 'u8[1024]{0}', space=vmem, size = 0x400, scoped, tag = 'output window, operand 0']
    %7 = vsyncpa [#allocation3], 0
    %s8 = scalar_lea.sflag [#allocation3], 1
    %9 = vsyncpa %s8, 0
    %10 = vsyncpa [#allocation6], 0
    %s11 = scalar_lea.sflag [#allocation6], 1
    %12 = vsyncpa %s11, 0
    %13 = vsyncpa [#allocation4], 0
    %s14 = scalar_lea.sflag [#allocation4], 1
    %15 = vsyncpa %s14, 0
    loop: start=0, step=1, limit=4
    $region2: #{tpu_custom_call.1} parent=1 // loop_pre_header
      _
    $region3: #{tpu_custom_call.1} parent=1 // loop_header
      %s17 = sphi 0, %s21
      %p18 = scmp.ge.s32.totalorder %s17, 4
      %s24 = sphi 0, %s36
      %s25 = sphi 0, %s32
      %s26 = sphi 0, %s24
      %s27 = sphi 0, %s25
      %s28 = sphi 0, %s26
      %s29 = sphi 0, %s27
      %s41 = sphi 0, %s43
      %s44 = sphi 0, %s41
      %s45 = sphi 0, %s44
      %s61 = sphi 0, %s45
      %s69 = sphi 0, %s71
      %s72 = sphi 0, %s69
      %s73 = sphi 0, %s72
      %s89 = sphi 0, %s73
      %s95 = sphi 0, %s97
      %s98 = sphi 0, %s95
      %s99 = sphi 0, %s98
      %s115 = sphi 0, %s99
    $region4: #{tpu_custom_call.1} parent=1 // loop_header_branch
      %20 = sbr.rel (%p18) target = $region8
    $region5: #{tpu_custom_call.1} parent=1 // loop_body
      %s22 = ssub.s32 %s17, 1
      %s23 = ssub.s32 %s17, 2
      %s30 = sadd.s32 1, %s25
      %p31 = scmp.ge.s32.totalorder %s30, 1
      %s32 = scalar_select %p31, 0, %s30
      %s33 = sadd.s32 1, %s24
      %s34 = scalar_select %p31, %s33, %s24
      %p35 = scmp.ge.s32.totalorder %s34, 2
      %s36 = scalar_select %p35, 0, %s34
      %s37 = sadd.s32 %s24, %s25
      %s38 = sadd.s32 %s36, %s32
      %s39 = ssub.s32 %s37, %s38
      %p40 = scmp.eq.s32.totalorder %s39, 0
      %s42 = sadd.s32 %s41, 1
      %s43 = scalar_select %p40, %s41, %s42
      %p46 = pneg %p40
      %p47 = scmp.eq.s32.totalorder %s17, 1
      %p48 = por %p46, %p47
      %p49 = scmp.ne.s32.totalorder %s41, %s44
      %p50 = scmp.eq.s32.totalorder %s17, 0
      %p51 = por %p49, %p50
      %p52 = scmp.ne.s32.totalorder %s41, %s44
      %p53 = scmp.eq.s32.totalorder %s22, 1
      %p54 = por %p52, %p53
      %p55 = scmp.ne.s32.totalorder %s44, %s45
      %p56 = scmp.eq.s32.totalorder %s22, 0
      %p57 = por %p55, %p56
      %p58 = scmp.ne.s32.totalorder %s44, %s45
      %p59 = scmp.eq.s32.totalorder %s23, 1
      %p60 = por %p58, %p59
      %p62 = scmp.ne.s32.totalorder %s45, %s61
      %p63 = scmp.eq.s32.totalorder %s23, 0
      %p64 = por %p62, %p63
      %s65 = sadd.s32 %s24, %s25
      %s66 = sadd.s32 %s36, %s32
      %s67 = ssub.s32 %s65, %s66
      %p68 = scmp.eq.s32.totalorder %s67, 0
      %s70 = sadd.s32 %s69, 1
      %s71 = scalar_select %p68, %s69, %s70
      %p74 = pneg %p68
      %p75 = scmp.eq.s32.totalorder %s17, 1
      %p76 = por %p74, %p75
      %p77 = scmp.ne.s32.totalorder %s69, %s72
      %p78 = scmp.eq.s32.totalorder %s17, 0
      %p79 = por %p77, %p78
      %p80 = scmp.ne.s32.totalorder %s69, %s72
      %p81 = scmp.eq.s32.totalorder %s22, 1
      %p82 = por %p80, %p81
      %p83 = scmp.ne.s32.totalorder %s72, %s73
      %p84 = scmp.eq.s32.totalorder %s22, 0
      %p85 = por %p83, %p84
      %p86 = scmp.ne.s32.totalorder %s72, %s73
      %p87 = scmp.eq.s32.totalorder %s23, 1
      %p88 = por %p86, %p87
      %p90 = scmp.ne.s32.totalorder %s73, %s89
      %p91 = scmp.eq.s32.totalorder %s23, 0
      %p92 = por %p90, %p91
      %s93 = ssub.s32 %s24, %s36
      %p94 = scmp.eq.s32.totalorder %s93, 0
      %s96 = sadd.s32 %s95, 1
      %s97 = scalar_select %p94, %s95, %s96
      %p100 = pneg %p94
      %p101 = scmp.eq.s32.totalorder %s17, 1
      %p102 = por %p100, %p101
      %p103 = scmp.ne.s32.totalorder %s95, %s98
      %p104 = scmp.eq.s32.totalorder %s17, 0
      %p105 = por %p103, %p104
      %p106 = scmp.ne.s32.totalorder %s95, %s98
      %p107 = scmp.eq.s32.totalorder %s22, 1
      %p108 = por %p106, %p107
      %p109 = scmp.ne.s32.totalorder %s98, %s99
      %p110 = scmp.eq.s32.totalorder %s22, 0
      %p111 = por %p109, %p110
      %p112 = scmp.ne.s32.totalorder %s98, %s99
      %p113 = scmp.eq.s32.totalorder %s23, 1
      %p114 = por %p112, %p113
      %p116 = scmp.ne.s32.totalorder %s99, %s115
      %p117 = scmp.eq.s32.totalorder %s23, 0
      %p118 = por %p116, %p117
      %p119 = scmp.le.s32.totalorder 1, %s17
      %p120 = scmp.lt.s32.totalorder %s17, 3
      %p121 = pnand %p119, %p120
      %p122 = pneg %p121
      // Predicated region
      $region9: #{tpu_custom_call.1} parent=5 // pred_check
        _
      $region10: #{tpu_custom_call.1} parent=5 // pred_check_branch
        %124 = sbr.rel (%p121) target = $region12
      $region11: #{tpu_custom_call.1} parent=5 // pred_region
        %s125 = ssub.s32 %s17, 1
      $region12: #{tpu_custom_call.1} parent=5 // pred_fallthru
        _
      %p126 = scmp.lt.s32.totalorder %s17, 2
      // Predicated region
      $region13: #{tpu_custom_call.1} parent=5 // pred_check
        %p127 = pneg %p126
      $region14: #{tpu_custom_call.1} parent=5 // pred_check_branch
        %129 = sbr.rel (%p127) target = $region16
      $region15: #{tpu_custom_call.1} parent=5 // pred_region
        // Predicated region
        $region17: #{tpu_custom_call.1} parent=15 // pred_check
          %p130 = pneg %p51
        $region18: #{tpu_custom_call.1} parent=15 // pred_check_branch
          %132 = sbr.rel (%p130) target = $region20
        $region19: #{tpu_custom_call.1} parent=15 // pred_region
          %s133 = sand.u32 %s41, 1
          %s134 = scalar_lea.sflag [#allocation3], %s133
          %s135 = sand.u32 %s41, 1
          %s136 = smul.addr %s135, 8
          %s137 = scalar_lea.vmem [#allocation2], %s136
          %s138 = sadd.s32 %s24, %s25
          %s140 = ssub.s32 128, 128
          %141 = vsyncadd %s134, %s140
          %s142 = smul.addr %s138, 128
          %s143 = scalar_lea.hbm %s0, %s142
          %s145 = sshll.u32 %s137, 4
          %s146 = int_to_ptr.vmem [resolvable:$true] %s145
          %148 = dma.hbm_to_vmem [thread:$0]  %s143, 128, %s146, %s134
        $region20: #{tpu_custom_call.1} parent=15 // pred_fallthru
          _
        // Predicated region
        $region21: #{tpu_custom_call.1} parent=15 // pred_check
          %p149 = pneg %p79
        $region22: #{tpu_custom_call.1} parent=15 // pred_check_branch
          %151 = sbr.rel (%p149) target = $region24
        $region23: #{tpu_custom_call.1} parent=15 // pred_region
          %s152 = sand.u32 %s69, 1
          %s153 = scalar_lea.sflag [#allocation6], %s152
          %s154 = sand.u32 %s69, 1
          %s155 = smul.addr %s154, 8
          %s156 = scalar_lea.vmem [#allocation5], %s155
          %s157 = sadd.s32 %s24, %s25
          %s159 = ssub.s32 128, 128
          %160 = vsyncadd %s153, %s159
          %s161 = smul.addr %s157, 128
          %s162 = scalar_lea.hbm %s1, %s161
          %s164 = sshll.u32 %s156, 4
          %s165 = int_to_ptr.vmem [resolvable:$true] %s164
          %167 = dma.hbm_to_vmem [thread:$0]  %s162, 128, %s165, %s153
        $region24: #{tpu_custom_call.1} parent=15 // pred_fallthru
          _
      $region16: #{tpu_custom_call.1} parent=5 // pred_fallthru
        _
      %p168 = scmp.le.s32.totalorder 1, %s17
      %p169 = scmp.lt.s32.totalorder %s17, 3
      %p170 = pnand %p168, %p169
      %p171 = pneg %p170
      // Predicated region
      $region25: #{tpu_custom_call.1} parent=5 // pred_check
        _
      $region26: #{tpu_custom_call.1} parent=5 // pred_check_branch
        %173 = sbr.rel (%p170) target = $region28
      $region27: #{tpu_custom_call.1} parent=5 // pred_region
        %s174 = ssub.s32 %s17, 1
        %s175 = sand.u32 %s44, 1
        %s176 = scalar_lea.sflag [#allocation3], %s175
        %s177 = sand.u32 %s44, 1
        %s178 = smul.addr %s177, 8
        %s179 = scalar_lea.vmem [#allocation2], %s178
        // Predicated region
        $region29: #{tpu_custom_call.1} parent=27 // pred_check
          %p180 = pneg %p57
        $region30: #{tpu_custom_call.1} parent=27 // pred_check_branch
          %182 = sbr.rel (%p180) target = $region32
        $region31: #{tpu_custom_call.1} parent=27 // pred_region
          %183 = dma.done %s176, 128
        $region32: #{tpu_custom_call.1} parent=27 // pred_fallthru
          _
        %s184 = sand.u32 %s72, 1
        %s185 = scalar_lea.sflag [#allocation6], %s184
        %s186 = sand.u32 %s72, 1
        %s187 = smul.addr %s186, 8
        %s188 = scalar_lea.vmem [#allocation5], %s187
        // Predicated region
        $region33: #{tpu_custom_call.1} parent=27 // pred_check
          %p189 = pneg %p85
        $region34: #{tpu_custom_call.1} parent=27 // pred_check_branch
          %191 = sbr.rel (%p189) target = $region36
        $region35: #{tpu_custom_call.1} parent=27 // pred_region
          %192 = dma.done %s185, 128
        $region36: #{tpu_custom_call.1} parent=27 // pred_fallthru
          _
        %s193 = sand.u32 %s44, 1
        %s194 = scalar_lea.sflag [#allocation3], %s193
        %s195 = sand.u32 %s44, 1
        %s196 = smul.addr %s195, 8
        %s197 = scalar_lea.vmem [#allocation2], %s196
        %p198 = pneg %p57
        %p199 = pneg %p54
        %s200 = sand.u32 %s72, 1
        %s201 = scalar_lea.sflag [#allocation6], %s200
        %s202 = sand.u32 %s72, 1
        %s203 = smul.addr %s202, 8
        %s204 = scalar_lea.vmem [#allocation5], %s203
        %p205 = pneg %p85
        %p206 = pneg %p82
        %p207 = pneg %p111
        %p208 = pneg %p108
        %s209 = sand.u32 %s98, 1
        %s210 = scalar_lea.sflag [#allocation4], %s209
        %s211 = sand.u32 %s98, 1
        %s212 = scalar_lea.vmem [#allocation7], %s211
        %s213 = sadd.s32 %s26, %s27
        %s214 = sadd.s32 %s26, %s27
        %p215 = scmp.eq.s32.totalorder %s27, 0
        // Predicated region
        $region37: #{tpu_custom_call.1} parent=27 // pred_check
          %p216 = pneg %p215
        $region38: #{tpu_custom_call.1} parent=27 // pred_check_branch
          %218 = sbr.rel (%p216) target = $region40
        $region39: #{tpu_custom_call.1} parent=27 // pred_region
          %219 = vst [vmem:[%s212] sm:$0x1] 0.0
        $region40: #{tpu_custom_call.1} parent=27 // pred_fallthru
          _
        %v220 = vld [vmem:[%s179] sm:$0xff]
        %v221 = vld [vmem:[%s188] sm:$0xff]
        %v222 = vlog2.pop %v220
        %v223 = vmul.f32 %v222, 0.6931472
        %v224 = vmax.f32 %v223, -100.0
        %v225 = vsub.f32 1.0, %v220
        %v226 = vlog2.pop %v225
        %v227 = vmul.f32 %v226, 0.6931472
        %v228 = vmax.f32 %v227, -100.0
        %v229 = vsub.f32 %v224, %v228
        %v230 = vmul.f32 %v221, %v229
        %v231 = vadd.f32 %v230, %v228
        %v232 = vrot.slane %v231, 4
        %v233 = vadd.f32 %v231, %v232
        %v234 = vrot.slane %v233, 2
        %v235 = vadd.f32 %v233, %v234
        %v236 = vrot.slane %v235, 1
        %v237 = vadd.f32 %v235, %v236
        %v238 = vld [vmem:[%s212] sm:$0x1]
        %v239 = vadd.f32 %v238, %v237
        %240 = vst [vmem:[%s212] sm:$0x1] %v239
        %s241 = sand.u32 %s98, 1
        %s242 = scalar_lea.sflag [#allocation4], %s241
        %s243 = sand.u32 %s98, 1
        %s244 = scalar_lea.vmem [#allocation7], %s243
        // Predicated region
        $region41: #{tpu_custom_call.1} parent=27 // pred_check
          %p245 = pneg %p108
        $region42: #{tpu_custom_call.1} parent=27 // pred_check_branch
          %247 = sbr.rel (%p245) target = $region44
        $region43: #{tpu_custom_call.1} parent=27 // pred_region
          %s249 = ssub.s32 16, 16
          %250 = vsyncadd %s242, %s249
          %s251 = smul.addr %s26, 16
          %s252 = scalar_lea.hbm %s2, %s251
          %s254 = sshll.u32 %s244, 4
          %s255 = int_to_ptr.vmem [resolvable:$true] %s254
          %257 = dma.vmem_to_hbm [thread:$0]  %s255, 16, %s252, %s242
        $region44: #{tpu_custom_call.1} parent=27 // pred_fallthru
          _
      $region28: #{tpu_custom_call.1} parent=5 // pred_fallthru
        _
      %p258 = scmp.le.s32.totalorder 2, %s17
      // Predicated region
      $region45: #{tpu_custom_call.1} parent=5 // pred_check
        %p259 = pneg %p258
      $region46: #{tpu_custom_call.1} parent=5 // pred_check_branch
        %261 = sbr.rel (%p259) target = $region48
      $region47: #{tpu_custom_call.1} parent=5 // pred_region
        %s262 = ssub.s32 %s17, 2
        // Predicated region
        $region49: #{tpu_custom_call.1} parent=47 // pred_check
          %p263 = pneg %p114
        $region50: #{tpu_custom_call.1} parent=47 // pred_check_branch
          %265 = sbr.rel (%p263) target = $region52
        $region51: #{tpu_custom_call.1} parent=47 // pred_region
          %s266 = sand.u32 %s99, 1
          %s267 = scalar_lea.sflag [#allocation4], %s266
          %s268 = sand.u32 %s99, 1
          %s269 = scalar_lea.vmem [#allocation7], %s268
          %270 = dma.done %s267, 16
        $region52: #{tpu_custom_call.1} parent=47 // pred_fallthru
          _
      $region48: #{tpu_custom_call.1} parent=5 // pred_fallthru
        _
    $region6: #{tpu_custom_call.1} parent=1 // loop_footer
      %s21 = sadd.s32 1, %s17
    $region7: #{tpu_custom_call.1} parent=1 // loop_footer_branch
      %16 = sbr.rel target = $region3
    $region8: #{tpu_custom_call.1} parent=1 // loop_exit
      _
    %271 = vsyncpa [#allocation3], 1
    %s272 = scalar_lea.sflag [#allocation3], 1
    %273 = vsyncpa %s272, 1
    %274 = vsyncpa [#allocation6], 1
    %s275 = scalar_lea.sflag [#allocation6], 1
    %276 = vsyncpa %s275, 1
    %277 = vsyncpa [#allocation4], 1
    %s278 = scalar_lea.sflag [#allocation4], 1
    %279 = vsyncpa %s278, 1

</llo_original>
